<compile_context>
chip_gen: v5e
topology: v5e:2x2
jax: 0.10.0
libtpu: 0.0.40
codegen_flags: <defaults>
</compile_context>

<pallas_src>
import functools
import math

import jax
import jax.numpy as jnp
from jax.experimental import pallas as pl
from jax.experimental.pallas import tpu as pltpu


def _round_up(x, m):
    return ((x + m - 1) // m) * m


def _focal_kernel(logits_ref, labels_ref, alpha_ref, o_ref, acc_ref, *,
                  gamma, hw, tile, has_alpha, need_mask):
    j = pl.program_id(1)

    @pl.when(j == 0)
    def _():
        acc_ref[...] = jnp.zeros_like(acc_ref)

    x = logits_ref[...].astype(jnp.float32)          # [bb, C, tile]
    lbl = labels_ref[...]                            # [bb, 1, tile] int32
    bb, c, _ = x.shape

    # log_softmax over the class (sublane) axis.
    m = jnp.max(x, axis=1, keepdims=True)            # [bb, 1, tile]
    xm = x - m
    sumexp = jnp.sum(jnp.exp(xm), axis=1, keepdims=True)
    log_denom = jnp.log(sumexp)                       # [bb, 1, tile]

    # Gather logpt at the target class via a one-hot sublane reduce.
    cls = jax.lax.broadcasted_iota(jnp.int32, (bb, c, tile), 1)
    onehot = (cls == lbl).astype(jnp.float32)         # [bb, C, tile]
    x_t = jnp.sum(xm * onehot, axis=1, keepdims=True)  # = x_t - m
    logpt = x_t - log_denom                            # [bb, 1, tile]

    if has_alpha:
        at = jnp.sum(onehot * alpha_ref[...], axis=1, keepdims=True)
        logpt_w = logpt * at
    else:
        logpt_w = logpt

    if gamma == 0.0:
        loss_pix = -logpt_w
    else:
        pt = jnp.exp(logpt)
        one_m = jnp.maximum(1.0 - pt, 0.0)            # guard pt rounding > 1
        if float(gamma).is_integer() and 1.0 <= gamma <= 8.0:
            f = one_m
            for _ in range(int(gamma) - 1):           # VPU multiplies, no pow
                f = f * one_m
        else:
            f = one_m ** gamma
        loss_pix = -f * logpt_w

    if need_mask:
        # Only emitted when hw % tile != 0 (lane padding / partial last tile).
        pix = j * tile + jax.lax.broadcasted_iota(jnp.int32, (1, 1, tile), 2)
        loss_pix = jnp.where(pix < hw, loss_pix, 0.0)

    # Running per-lane accumulator; one cross-lane reduce per batch block.
    acc_ref[...] += jnp.sum(loss_pix, axis=0)          # [1, tile]

    @pl.when(j == pl.num_programs(1) - 1)
    def _():
        o_ref[...] = jnp.sum(acc_ref[...]).reshape(1, 1, 1)


def _select_tiling(B, C, hw_pad, desired, itemsize):
    """Pick (batch_block, lane_tile) against a VMEM budget that fits v7x."""
    c_pad = _round_up(max(C, 8), 8)                   # sublane padding
    # Per-lane VMEM footprint: 2x double-buffered logits block,
    # ~5 materialized (C, tile) f32 temporaries, 2x labels block (1->8 pad).
    bytes_per_lane = 2 * c_pad * itemsize + 5 * c_pad * 4 + 2 * 8 * 4
    budget = 44 << 20                                 # headroom under 64 MiB
    max_lanes = max(128, (budget // bytes_per_lane) // 128 * 128)
    if hw_pad >= desired:
        bb = 1
        tile = max(128, (min(desired, hw_pad, max_lanes) // 128) * 128)
    else:
        tile = hw_pad
        bb = max(1, min(B, desired // hw_pad, max_lanes // hw_pad))
        while B % bb:                                 # bb must divide B
            bb -= 1
    return bb, tile


@functools.partial(jax.jit, static_argnums=(3, 4, 5, 6))
def _focal_loss_impl(logits, target, alpha_col, gamma, size_average, tile_hw,
                     has_alpha):
    if logits.ndim > 2:
        B, C = logits.shape[0], logits.shape[1]
        hw = math.prod(logits.shape[2:])
        x3 = logits.reshape(B, C, hw)                 # free view of NCHW
    else:
        N, C = logits.shape
        x3 = logits.T.reshape(1, C, N)
        B, hw = 1, N

    labels = target.reshape(B, 1, hw).astype(jnp.int32)

    # Pad the lane axis to a multiple of 128 only when needed (rare).
    hw_pad = _round_up(hw, 128)
    if hw_pad != hw:
        x3 = jnp.pad(x3, ((0, 0), (0, 0), (0, hw_pad - hw)))
        labels = jnp.pad(labels, ((0, 0), (0, 0), (0, hw_pad - hw)),
                         constant_values=-1)

    desired = _round_up(max(tile_hw, 128), 128)
    bb, tile = _select_tiling(B, C, hw_pad, desired, x3.dtype.itemsize)
    grid_b = B // bb
    grid_hw = pl.cdiv(hw_pad, tile)
    need_mask = (hw % tile) != 0

    kernel = functools.partial(_focal_kernel, gamma=gamma, hw=hw, tile=tile,
                               has_alpha=has_alpha, need_mask=need_mask)

    partials = pl.pallas_call(
        kernel,
        out_shape=jax.ShapeDtypeStruct((grid_b, 1, 1), jnp.float32),
        grid=(grid_b, grid_hw),
        in_specs=[
            pl.BlockSpec((bb, C, tile), lambda b, j: (b, 0, j)),
            pl.BlockSpec((bb, 1, tile), lambda b, j: (b, 0, j)),
            pl.BlockSpec((C, 1), lambda b, j: (0, 0)),
        ],
        out_specs=pl.BlockSpec((1, 1, 1), lambda b, j: (b, 0, 0)),
        scratch_shapes=[pltpu.VMEM((1, tile), jnp.float32)],
        compiler_params=pltpu.CompilerParams(
            dimension_semantics=("parallel", "arbitrary"),
            vmem_limit_bytes=56 * 1024 * 1024),
    )(x3, labels, alpha_col)

    total = jnp.sum(partials)
    n = B * hw
    return total / n if size_average else total


def focal_loss(logits, target, *, gamma=0.0, alpha=None, size_average=True,
               tile_hw=16384):
    """Pallas implementation of FocalLoss.forward.

    logits: [B, C, H, W] (or [N, C]) float (any dtype; cast happens in-kernel)
    target: integer labels with B*H*W (or N) elements
    """
    C = logits.shape[1] if logits.ndim > 2 else logits.shape[-1]
    if alpha is None:
        alpha_col = jnp.ones((C, 1), jnp.float32)
        has_alpha = False
    else:
        if isinstance(alpha, (float, int)):
            a = jnp.asarray([alpha, 1.0 - alpha], jnp.float32)
        else:
            a = jnp.asarray(alpha, jnp.float32)
        if a.shape[0] < C:
            a = jnp.pad(a, (0, C - a.shape[0]))
        alpha_col = a[:C].reshape(C, 1)
        has_alpha = True
    return _focal_loss_impl(logits, target, alpha_col, float(gamma),
                            bool(size_average), int(tile_hw), has_alpha)


def _focal_loss_ref(logits, target, gamma=0.0, alpha_vec=None,
                    size_average=True):
    """Pure-JAX reference mirroring the PyTorch FocalLoss.forward."""
    if logits.ndim > 2:
        B, C = logits.shape[:2]
        x = logits.reshape(B, C, -1)
        x = jnp.transpose(x, (0, 2, 1)).reshape(-1, C)
    else:
        x = logits
    t = target.reshape(-1).astype(jnp.int32)
    logsm = jax.nn.log_softmax(x.astype(jnp.float32), axis=1)
    logpt = jnp.take_along_axis(logsm, t[:, None], axis=1)[:, 0]
    pt = jnp.exp(logpt)
    if alpha_vec is not None:
        logpt = logpt * alpha_vec[t]
    if gamma == 0.0:
        loss = -logpt
    else:
        loss = -((1.0 - pt) ** gamma) * logpt
    return loss.mean() if size_average else loss.sum()


if __name__ == "__main__":
    key = jax.random.PRNGKey(0)
    k1, k2, k3, k4 = jax.random.split(key, 4)

    # Module defaults: gamma=0, alpha=None, size_average=True.
    B, C, H, W = 2, 4, 16, 16
    logits = jax.random.normal(k1, (B, C, H, W), dtype=jnp.float32)
    target = jax.random.randint(k2, (B, H, W), 0, C, dtype=jnp.int32)

    loss0 = focal_loss(logits, target)
    alpha_list = [0.1, 0.2, 0.3, 0.4]
    loss2 = focal_loss(logits, target, gamma=2.0, alpha=alpha_list)

    # Odd spatial size (exercises lane padding + tail mask), integer gamma,
    # sum reduction, alpha=None.
    logits_b = jax.random.normal(k3, (2, 3, 15, 15), dtype=jnp.float32)
    target_b = jax.random.randint(k4, (2, 15, 15), 0, 3, dtype=jnp.int32)
    loss3 = focal_loss(logits_b, target_b, gamma=3.0, size_average=False)

    jax.block_until_ready((loss0, loss2, loss3))

    ref0 = _focal_loss_ref(logits, target)
    ref2 = _focal_loss_ref(logits, target, gamma=2.0,
                           alpha_vec=jnp.asarray(alpha_list, jnp.float32))
    ref3 = _focal_loss_ref(logits_b, target_b, gamma=3.0, size_average=False)
    assert jnp.allclose(loss0, ref0, atol=1e-4, rtol=1e-4), (loss0, ref0)
    assert jnp.allclose(loss2, ref2, atol=1e-4, rtol=1e-4), (loss2, ref2)
    assert jnp.allclose(loss3, ref3, atol=1e-4, rtol=1e-4), (loss3, ref3)

    print("KERNEL_OK")
</pallas_src>

<mosaic_0001>
module attributes {stable_mosaic.version = 11 : i64} {
  func.func @_focal_kernel(%arg0: i32, %arg1: i32, %arg2: memref<2x4x256xf32, #tpu.memory_space<vmem>>, %arg3: memref<2x1x256xi32, #tpu.memory_space<vmem>>, %arg4: memref<4x1xf32, #tpu.memory_space<vmem>>, %arg5: memref<1x1x1xf32, #tpu.memory_space<vmem>>, %arg6: memref<1x256xf32, #tpu.memory_space<vmem>>) attributes {dimension_semantics = [#tpu.dimension_semantics<parallel>, #tpu.dimension_semantics<arbitrary>], iteration_bounds = array<i64: 1, 1>, scalar_prefetch = 0 : i64, scratch_operands = 1 : i64, tpu.core_type = #tpu.core_type<tc>, window_params = [{transform_indices = @transform_0, window_bounds = array<i64: 2, 4, 256>}, {transform_indices = @transform_1, window_bounds = array<i64: 2, 1, 256>}, {pipeline_mode = #tpu.pipeline_mode<synchronous>, transform_indices = @transform_2, window_bounds = array<i64: 4, 1>}, {transform_indices = @transform_3, window_bounds = array<i64: 1, 1, 1>}]} {
    %c0_i32 = arith.constant 0 : i32
    %0 = arith.cmpi eq, %arg1, %c0_i32 : i32
    %1 = arith.extui %0 : i1 to i32
    %c0_i32_0 = arith.constant 0 : i32
    %2 = arith.cmpi ne, %1, %c0_i32_0 : i32
    scf.if %2 {
      %cst_16 = arith.constant 0.000000e+00 : f32
      %31 = vector.broadcast %cst_16 : f32 to vector<1x256xf32>
      %c0_17 = arith.constant 0 : index
      %c0_18 = arith.constant 0 : index
      %32 = vector.load %arg6[%c0_17, %c0_18] : memref<1x256xf32, #tpu.memory_space<vmem>>, vector<1x256xf32>
      tpu.vector_store %arg6[%c0_17, %c0_18], %31 {strides = array<i32>} : memref<1x256xf32, #tpu.memory_space<vmem>>, vector<1x256xf32>,
    } else {
    }
    %c0 = arith.constant 0 : index
    %c0_1 = arith.constant 0 : index
    %c0_2 = arith.constant 0 : index
    %3 = vector.load %arg2[%c0, %c0_1, %c0_2] : memref<2x4x256xf32, #tpu.memory_space<vmem>>, vector<2x4x256xf32>
    %c0_3 = arith.constant 0 : index
    %c0_4 = arith.constant 0 : index
    %c0_5 = arith.constant 0 : index
    %4 = vector.load %arg3[%c0_3, %c0_4, %c0_5] : memref<2x1x256xi32, #tpu.memory_space<vmem>>, vector<2x1x256xi32>
    %cst = arith.constant dense<0xFF800000> : vector<2x256xf32>
    %5 = vector.multi_reduction <maximumf>, %3, %cst [1] : vector<2x4x256xf32> to vector<2x256xf32>
    %6 = vector.shape_cast %5 : vector<2x256xf32> to vector<2x1x256xf32>
    %7 = vector.broadcast %6 : vector<2x1x256xf32> to vector<2x4x256xf32>
    %8 = arith.subf %3, %7 : vector<2x4x256xf32>
    %9 = math.exp %8 : vector<2x4x256xf32>
    %cst_6 = arith.constant dense<0.000000e+00> : vector<2x256xf32>
    %10 = vector.multi_reduction <add>, %9, %cst_6 [1] : vector<2x4x256xf32> to vector<2x256xf32>
    %11 = vector.shape_cast %10 : vector<2x256xf32> to vector<2x1x256xf32>
    %12 = math.log %11 : vector<2x1x256xf32>
    %13 = tpu.iota {dimensions = array<i32: 1>} : vector<2x4x256xi32>
    %14 = vector.broadcast %4 : vector<2x1x256xi32> to vector<2x4x256xi32>
    %15 = arith.cmpi eq, %13, %14 : vector<2x4x256xi32>
    %16 = arith.extui %15 : vector<2x4x256xi1> to vector<2x4x256xi32>
    %17 = arith.sitofp %16 : vector<2x4x256xi32> to vector<2x4x256xf32>
    %18 = arith.mulf %8, %17 : vector<2x4x256xf32>
    %cst_7 = arith.constant dense<0.000000e+00> : vector<2x256xf32>
    %19 = vector.multi_reduction <add>, %18, %cst_7 [1] : vector<2x4x256xf32> to vector<2x256xf32>
    %20 = vector.shape_cast %19 : vector<2x256xf32> to vector<2x1x256xf32>
    %21 = arith.subf %20, %12 : vector<2x1x256xf32>
    %cst_8 = arith.constant 0.000000e+00 : f32
    %22 = vector.broadcast %cst_8 : f32 to vector<2x1x256xf32>
    %23 = arith.subf %22, %21 : vector<2x1x256xf32>
    %c0_9 = arith.constant 0 : index
    %c0_10 = arith.constant 0 : index
    %24 = vector.load %arg6[%c0_9, %c0_10] : memref<1x256xf32, #tpu.memory_space<vmem>>, vector<1x256xf32>
    %cst_11 = arith.constant dense<0.000000e+00> : vector<1x256xf32>
    %25 = vector.multi_reduction <add>, %23, %cst_11 [0] : vector<2x1x256xf32> to vector<1x256xf32>
    %26 = arith.addf %24, %25 : vector<1x256xf32>
    %c0_12 = arith.constant 0 : index
    %c0_13 = arith.constant 0 : index
    %27 = vector.load %arg6[%c0_12, %c0_13] : memref<1x256xf32, #tpu.memory_space<vmem>>, vector<1x256xf32>
    tpu.vector_store %arg6[%c0_12, %c0_13], %26 {strides = array<i32>} : memref<1x256xf32, #tpu.memory_space<vmem>>, vector<1x256xf32>,
    %c0_i32_14 = arith.constant 0 : i32
    %28 = arith.cmpi eq, %arg1, %c0_i32_14 : i32
    %29 = arith.extui %28 : i1 to i32
    %c0_i32_15 = arith.constant 0 : i32
    %30 = arith.cmpi ne, %29, %c0_i32_15 : i32
    scf.if %30 {
      %c0_16 = arith.constant 0 : index
      %c0_17 = arith.constant 0 : index
      %31 = vector.load %arg6[%c0_16, %c0_17] : memref<1x256xf32, #tpu.memory_space<vmem>>, vector<1x256xf32>
      %32 = vector.shape_cast %31 : vector<1x256xf32> to vector<1x1x256xf32>
      %cst_18 = arith.constant dense<0.000000e+00> : vector<1xf32>
      %33 = vector.multi_reduction <add>, %32, %cst_18 [1, 2] : vector<1x1x256xf32> to vector<1xf32>
      %34 = vector.shape_cast %33 : vector<1xf32> to vector<1x1x1xf32>
      %35 = vector.extract %34[0, 0, 0] : f32 from vector<1x1x1xf32>
      %36 = vector.broadcast %35 : f32 to vector<1x1x1xf32>
      %c0_19 = arith.constant 0 : index
      %c0_20 = arith.constant 0 : index
      %c0_21 = arith.constant 0 : index
      %37 = vector.load %arg5[%c0_19, %c0_20, %c0_21] : memref<1x1x1xf32, #tpu.memory_space<vmem>>, vector<1x1x1xf32>
      tpu.vector_store %arg5[%c0_19, %c0_20, %c0_21], %36 {strides = array<i32>} : memref<1x1x1xf32, #tpu.memory_space<vmem>>, vector<1x1x1xf32>,
    } else {
    }
    return
  }
  func.func @transform_0(%arg0: i32, %arg1: i32) -> (i32, i32, i32) {
    %c0_i32 = arith.constant 0 : i32
    %c0_i32_0 = arith.constant 0 : i32
    return %arg0, %c0_i32, %arg1 : i32, i32, i32
  }
  func.func @transform_1(%arg0: i32, %arg1: i32) -> (i32, i32, i32) {
    %c0_i32 = arith.constant 0 : i32
    %c0_i32_0 = arith.constant 0 : i32
    return %arg0, %c0_i32, %arg1 : i32, i32, i32
  }
  func.func @transform_2(%arg0: i32, %arg1: i32) -> (i32, i32) {
    %c0_i32 = arith.constant 0 : i32
    %c0_i32_0 = arith.constant 0 : i32
    %c0_i32_1 = arith.constant 0 : i32
    return %c0_i32, %c0_i32_0 : i32, i32
  }
  func.func @transform_3(%arg0: i32, %arg1: i32) -> (i32, i32, i32) {
    %c0_i32 = arith.constant 0 : i32
    %c0_i32_0 = arith.constant 0 : i32
    %c0_i32_1 = arith.constant 0 : i32
    return %arg0, %c0_i32, %c0_i32_0 : i32, i32, i32
  }
}

</mosaic_0001>

<llo_original>
// kernel: _focal_loss_impl.1
$region0: #{_focal_loss_impl.1}
  #allocation0 [shape = 'u32[]', space=smem, size = 0x4, offset = 0x4, fixed_abs, tag = 'smem constant byte address 0x4 - core index']
  #allocation1 [shape = 'u32[72,128]{1,0:T(1,128)}', space=vmem, size = 0x9000, scoped, tag = 'internal scratch']
  #allocation2 [shape = 'f32[1,256]{1,0:T(1,128)}', space=vmem, size = 0x400, scoped, tag = 'scratch operand']
  %s0 = inlined_call_operand.vmem [shape: f32[2,4,256], index: 0, kind: input, shape index: {}]
  %s1 = inlined_call_operand.vmem [shape: s32[2,1,256], index: 1, kind: input, shape index: {}]
  %s2 = inlined_call_operand.vmem [shape: f32[4,1], index: 2, kind: input, shape index: {}]
  %s3 = inlined_call_operand.hbm [shape: f32[1,1,1], index: 3, kind: output, shape index: {}]
  %s4 = sld [smem:[#allocation0]]
  $region30: #{_focal_loss_impl.1} parent=0
    _
  %s6 = ssub.s32 1, %s4
  %s7 = scalar_select 0, %s6, %s4
  $region1: #{_focal_loss_impl.1} parent=0
    #allocation3 [shape = 'u8[512]{0}', space=vmem, size = 0x400, scoped, tag = 'output window, operand 0, single buffered']
    #allocation4 [shape = 's32[1]{0}', space=sflag, size = 0x4, scoped, tag = 'scoped memory for _focal_loss_impl.1']
    %8 = vsyncpa [#allocation4], 0
    // Predicated region
    $region2: #{_focal_loss_impl.1} parent=1 // pred_check
      _
    $region3: #{_focal_loss_impl.1} parent=1 // pred_check_branch
      %10 = sbr.rel (0) target = $region5
    $region4: #{_focal_loss_impl.1} parent=1 // pred_region
      _
    $region5: #{_focal_loss_impl.1} parent=1 // pred_fallthru
      _
    // Predicated region
    $region6: #{_focal_loss_impl.1} parent=1 // pred_check
      _
    $region7: #{_focal_loss_impl.1} parent=1 // pred_check_branch
      %12 = sbr.rel (0) target = $region9
    $region8: #{_focal_loss_impl.1} parent=1 // pred_region
      _
    $region9: #{_focal_loss_impl.1} parent=1 // pred_fallthru
      _
    // Predicated region
    $region10: #{_focal_loss_impl.1} parent=1 // pred_check
      _
    $region11: #{_focal_loss_impl.1} parent=1 // pred_check_branch
      %14 = sbr.rel (0) target = $region13
    $region12: #{_focal_loss_impl.1} parent=1 // pred_region
      _
    $region13: #{_focal_loss_impl.1} parent=1 // pred_fallthru
      _
    %p15 = scmp.eq.s32.totalorder 0, 0
    // Predicated region
    $region14: #{_focal_loss_impl.1} parent=1 // pred_check
      %p16 = pneg %p15
    $region15: #{_focal_loss_impl.1} parent=1 // pred_check_branch
      %18 = sbr.rel (%p16) target = $region17
    $region16: #{_focal_loss_impl.1} parent=1 // pred_region
      %v19 = vlaneseq
      %vm20 = vcmp.ge.s32.totalorder %v19, 0
      %vm21 = vcmp.lt.s32.totalorder %v19, 256
      %vm22 = vmand %vm20, %vm21
      %23 = vst.msk [vmem:[#allocation2] sm:$0x3] %vm22, 0.0
    $region17: #{_focal_loss_impl.1} parent=1 // pred_fallthru
      _
    %v24 = vld [vmem:[%s0] sm:$0xff]
    %v25 = vld [vmem:[%s0 + $0x8] sm:$0xff]
    %v26 = vld [vmem:[%s1] sm:$0x3]
    %v27 = vld [vmem:[%s1 + $0x2] sm:$0x3]
    %30 = vst [vmem:[#allocation1] ss:$2 sm:$0xff] %v24
    %v31 = vld.sshfl [vmem:[#allocation1] sm:$0xff pattern:$0x75316420]
    %v32 = vld.sshfl [vmem:[#allocation1 + $0x8] sm:$0xff pattern:$0x75316420]
    %s33 = scalar_lea.vmem [#allocation1], 16
    %34 = vst [vmem:[%s33] ss:$2 sm:$0xff] %v25
    %v35 = vld.sshfl [vmem:[#allocation1 + $0x10] sm:$0xff pattern:$0x75316420]
    %v36 = vld.sshfl [vmem:[#allocation1 + $0x18] sm:$0xff pattern:$0x75316420]
    %vm41 = vcmask 1043456
    %v42 = vsel %vm41, %v31, -inf
    %v43 = vrot.slane %v42, 4
    %v44 = vmax.f32 %v42, %v43
    %v45 = vrot.slane %v44, 2
    %v46 = vmax.f32 %v44, %v45
    %v47 = vrot.slane %v46, 1
    %v48 = vmax.f32 %v46, %v47
    %v49 = vsel %vm41, %v32, -inf
    %v50 = vrot.slane %v49, 4
    %v51 = vmax.f32 %v49, %v50
    %v52 = vrot.slane %v51, 2
    %v53 = vmax.f32 %v51, %v52
    %v54 = vrot.slane %v53, 1
    %v55 = vmax.f32 %v53, %v54
    %v56 = vsel %vm41, %v35, -inf
    %v57 = vrot.slane %v56, 4
    %v58 = vmax.f32 %v56, %v57
    %v59 = vrot.slane %v58, 2
    %v60 = vmax.f32 %v58, %v59
    %v61 = vrot.slane %v60, 1
    %v62 = vmax.f32 %v60, %v61
    %v63 = vsel %vm41, %v36, -inf
    %v64 = vrot.slane %v63, 4
    %v65 = vmax.f32 %v63, %v64
    %v66 = vrot.slane %v65, 2
    %v67 = vmax.f32 %v65, %v66
    %v68 = vrot.slane %v67, 1
    %v69 = vmax.f32 %v67, %v68
    %v74 = vrot.slane %v55, 4
    %v75 = vrot.slane %v69, 4
    %v76 = vsel %vm41, %v48, %v74
    %v77 = vsel %vm41, %v62, %v75
    %v80 = vsub.f32 %v24, %v76
    %v81 = vsub.f32 %v25, %v77
    %v82 = vmul.f32 %v80, 1.442695
    %v83 = vpow.pop %v82
    %v84 = vmul.f32 %v81, 1.442695
    %v85 = vpow.pop %v84
    %88 = vst [vmem:[#allocation1] ss:$2 sm:$0xff] %v83
    %v89 = vld.sshfl [vmem:[#allocation1] sm:$0xff pattern:$0x75316420]
    %v90 = vld.sshfl [vmem:[#allocation1 + $0x8] sm:$0xff pattern:$0x75316420]
    %s91 = scalar_lea.vmem [#allocation1], 16
    %92 = vst [vmem:[%s91] ss:$2 sm:$0xff] %v85
    %v93 = vld.sshfl [vmem:[#allocation1 + $0x10] sm:$0xff pattern:$0x75316420]
    %v94 = vld.sshfl [vmem:[#allocation1 + $0x18] sm:$0xff pattern:$0x75316420]
    %v99 = vsel %vm41, %v89, 0.0
    %v100 = vrot.slane %v99, 4
    %v101 = vadd.f32 %v99, %v100
    %v102 = vrot.slane %v101, 2
    %v103 = vadd.f32 %v101, %v102
    %v104 = vrot.slane %v103, 1
    %v105 = vadd.f32 %v103, %v104
    %v106 = vsel %vm41, %v90, 0.0
    %v107 = vrot.slane %v106, 4
    %v108 = vadd.f32 %v106, %v107
    %v109 = vrot.slane %v108, 2
    %v110 = vadd.f32 %v108, %v109
    %v111 = vrot.slane %v110, 1
    %v112 = vadd.f32 %v110, %v111
    %v113 = vsel %vm41, %v93, 0.0
    %v114 = vrot.slane %v113, 4
    %v115 = vadd.f32 %v113, %v114
    %v116 = vrot.slane %v115, 2
    %v117 = vadd.f32 %v115, %v116
    %v118 = vrot.slane %v117, 1
    %v119 = vadd.f32 %v117, %v118
    %v120 = vsel %vm41, %v94, 0.0
    %v121 = vrot.slane %v120, 4
    %v122 = vadd.f32 %v120, %v121
    %v123 = vrot.slane %v122, 2
    %v124 = vadd.f32 %v122, %v123
    %v125 = vrot.slane %v124, 1
    %v126 = vadd.f32 %v124, %v125
    %v127 = vlog2.pop %v105
    %v128 = vmul.f32 %v127, 0.6931472
    %v129 = vlog2.pop %v112
    %v130 = vmul.f32 %v129, 0.6931472
    %v131 = vlog2.pop %v119
    %v132 = vmul.f32 %v131, 0.6931472
    %v133 = vlog2.pop %v126
    %v134 = vmul.f32 %v133, 0.6931472
    %v135 = vlaneseq
    %v136 = vshrl.u32 %v135, 7
    %v137 = vperm.slane %v26, 0
    %v138 = vperm.slane %v26, 1
    %v139 = vperm.slane %v27, 0
    %v140 = vperm.slane %v27, 1
    %vm141 = vcmp.eq.s32.totalorder %v136, %v137
    %vm142 = vcmp.eq.s32.totalorder %v136, %v138
    %vm143 = vcmp.eq.s32.totalorder %v136, %v139
    %vm144 = vcmp.eq.s32.totalorder %v136, %v140
    %v145 = vsel %vm141, 1, 0
    %v146 = vsel %vm142, 1, 0
    %v147 = vsel %vm143, 1, 0
    %v148 = vsel %vm144, 1, 0
    %v149 = vcvt.s32.f32 %v145
    %v150 = vcvt.s32.f32 %v146
    %v151 = vcvt.s32.f32 %v147
    %v152 = vcvt.s32.f32 %v148
    %v157 = vrot.slane %v150, 4
    %v158 = vrot.slane %v152, 4
    %v159 = vsel %vm41, %v149, %v157
    %v160 = vsel %vm41, %v151, %v158
    %v163 = vmul.f32 %v80, %v159
    %v164 = vmul.f32 %v81, %v160
    %167 = vst [vmem:[#allocation1] ss:$2 sm:$0xff] %v163
    %v168 = vld.sshfl [vmem:[#allocation1] sm:$0xff pattern:$0x75316420]
    %v169 = vld.sshfl [vmem:[#allocation1 + $0x8] sm:$0xff pattern:$0x75316420]
    %s170 = scalar_lea.vmem [#allocation1], 16
    %171 = vst [vmem:[%s170] ss:$2 sm:$0xff] %v164
    %v172 = vld.sshfl [vmem:[#allocation1 + $0x10] sm:$0xff pattern:$0x75316420]
    %v173 = vld.sshfl [vmem:[#allocation1 + $0x18] sm:$0xff pattern:$0x75316420]
    %v178 = vsel %vm41, %v168, 0.0
    %v179 = vrot.slane %v178, 4
    %v180 = vadd.f32 %v178, %v179
    %v181 = vrot.slane %v180, 2
    %v182 = vadd.f32 %v180, %v181
    %v183 = vrot.slane %v182, 1
    %v184 = vadd.f32 %v182, %v183
    %v185 = vsel %vm41, %v169, 0.0
    %v186 = vrot.slane %v185, 4
    %v187 = vadd.f32 %v185, %v186
    %v188 = vrot.slane %v187, 2
    %v189 = vadd.f32 %v187, %v188
    %v190 = vrot.slane %v189, 1
    %v191 = vadd.f32 %v189, %v190
    %v192 = vsel %vm41, %v172, 0.0
    %v193 = vrot.slane %v192, 4
    %v194 = vadd.f32 %v192, %v193
    %v195 = vrot.slane %v194, 2
    %v196 = vadd.f32 %v194, %v195
    %v197 = vrot.slane %v196, 1
    %v198 = vadd.f32 %v196, %v197
    %v199 = vsel %vm41, %v173, 0.0
    %v200 = vrot.slane %v199, 4
    %v201 = vadd.f32 %v199, %v200
    %v202 = vrot.slane %v201, 2
    %v203 = vadd.f32 %v201, %v202
    %v204 = vrot.slane %v203, 1
    %v205 = vadd.f32 %v203, %v204
    %v206 = vsub.f32 %v184, %v128
    %v207 = vsub.f32 %v191, %v130
    %v208 = vsub.f32 %v198, %v132
    %v209 = vsub.f32 %v205, %v134
    %v210 = vsub.f32 0.0, %v206
    %v211 = vsub.f32 0.0, %v207
    %v212 = vsub.f32 0.0, %v208
    %v213 = vsub.f32 0.0, %v209
    %v214 = vld [vmem:[#allocation2] sm:$0x3]
    %v215 = vadd.f32 %v210, %v212
    %v216 = vadd.f32 %v211, %v213
    %v219 = vrot.slane %v216, 7
    %vm220 = vcmask 1040384
    %v221 = vsel %vm220, %v215, %v219
    %v223 = vadd.f32 %v214, %v221
    %v224 = vlaneseq
    %vm225 = vcmp.ge.s32.totalorder %v224, 0
    %vm226 = vcmp.lt.s32.totalorder %v224, 256
    %vm227 = vmand %vm225, %vm226
    %228 = vst.msk [vmem:[#allocation2] sm:$0x3] %vm227, %v223
    // Predicated region
    $region18: #{_focal_loss_impl.1} parent=1 // pred_check
      %p229 = pneg %p15
    $region19: #{_focal_loss_impl.1} parent=1 // pred_check_branch
      %231 = sbr.rel (%p229) target = $region21
    $region20: #{_focal_loss_impl.1} parent=1 // pred_region
      %v232 = vld [vmem:[#allocation2] sm:$0x3]
      %v234 = vperm.slane %v232, 0
      %v235 = vperm.slane %v232, 1
      %v238 = vsel %vm220, %v234, 0.0
      %v239 = vsel %vm220, %v235, 0.0
      %v240 = vadd.f32 %v238, %v239
      %241 = vadd.xlane.f32.xlu0 %v240
      %v242 = vpop.xlane.xlu0 %241
      %v243 = vrot.slane %v242, 4
      %v244 = vadd.f32 %v242, %v243
      %v245 = vrot.slane %v244, 2
      %v246 = vadd.f32 %v244, %v245
      %v247 = vrot.slane %v246, 1
      %v248 = vadd.f32 %v246, %v247
      %s249 = vtos %v248
      %v250 = vstv %s249
      %vm251 = vcmask 0
      %252 = vst.msk [vmem:[#allocation3] sm:$0x1] %vm251, %v250
    $region21: #{_focal_loss_impl.1} parent=1 // pred_fallthru
      _
    // Predicated region
    $region22: #{_focal_loss_impl.1} parent=1 // pred_check
      _
    $region23: #{_focal_loss_impl.1} parent=1 // pred_check_branch
      %254 = sbr.rel (0) target = $region25
    $region24: #{_focal_loss_impl.1} parent=1 // pred_region
      %256 = vsyncadd [#allocation4], 0
      %s258 = sshll.u32 [#allocation3], 4
      %s259 = int_to_ptr.vmem [resolvable:$true] %s258
      %s260 = sshll.u32 %s3, 4
      %s261 = int_to_ptr.hbm [resolvable:$true] %s260
      %263 = dma.vmem_to_hbm [thread:$0]  %s259, 16, %s261, [#allocation4]
    $region25: #{_focal_loss_impl.1} parent=1 // pred_fallthru
      _
    // Predicated region
    $region26: #{_focal_loss_impl.1} parent=1 // pred_check
      _
    $region27: #{_focal_loss_impl.1} parent=1 // pred_check_branch
      %265 = sbr.rel (0) target = $region29
    $region28: #{_focal_loss_impl.1} parent=1 // pred_region
      %267 = dma.done [#allocation4], 16
    $region29: #{_focal_loss_impl.1} parent=1 // pred_fallthru
      _
    %268 = vsyncpa [#allocation4], 1

</llo_original>
